<compile_context>
chip_gen: v7x
topology: tpu7x:2x2x1
jax: 0.10.0
libtpu: 0.0.40
codegen_flags: <defaults>
</compile_context>

<pallas_src>
import jax
import jax.numpy as jnp
import numpy as np
from jax.experimental import pallas as pl
from jax.experimental.pallas import tpu as pltpu

_LANE = 128


def _make_channel_attention_kernel(batch, hw, s_tile, needs_mask):
    """Build the kernel closure for static (batch, hw, s_tile, mask) config."""

    def kernel(x_ref, w1_ref, w2_ref, out_ref, sum_ref, max_ref):
        # x_ref:  (B, C, s_tile) spatial tile      (input dtype, no upcast)
        # w1_ref: (C, hidden)    w2_ref: (hidden, C)
        # out_ref: (B, C)        sum_ref/max_ref: (B, C) f32 scratch accums
        s = pl.program_id(0)

        @pl.when(s == 0)
        def _init():
            sum_ref[...] = jnp.zeros_like(sum_ref)
            max_ref[...] = jnp.full_like(max_ref, -jnp.inf)

        chunk = x_ref[...]                                   # (B, C, s_tile)
        if needs_mask:
            lane = jax.lax.broadcasted_iota(jnp.int32, chunk.shape, 2)
            valid = (s * s_tile + lane) < hw
            chunk_sum = jnp.where(valid, chunk, jnp.zeros((), chunk.dtype))
            chunk_max = jnp.where(valid, chunk,
                                  jnp.asarray(-jnp.inf, chunk.dtype))
        else:
            chunk_sum = chunk
            chunk_max = chunk

        # Per-tile partial reductions, accumulated in f32.
        sum_ref[...] += jnp.sum(chunk_sum, axis=-1, dtype=jnp.float32)
        max_ref[...] = jnp.maximum(
            max_ref[...], jnp.max(chunk_max, axis=-1).astype(jnp.float32))

        @pl.when(s == pl.num_programs(0) - 1)
        def _finalize():
            avg = sum_ref[...] * (1.0 / hw)                  # (B, C)
            mx = max_ref[...]                                # (B, C)
            # Fuse both MLP branches: one pair of matmuls on (2B, C).
            pooled = jnp.concatenate([avg, mx], axis=0)      # (2B, C)
            w1 = w1_ref[...].astype(jnp.float32)             # (C, hidden)
            w2 = w2_ref[...].astype(jnp.float32)             # (hidden, C)
            h = jnp.maximum(
                jnp.dot(pooled, w1, preferred_element_type=jnp.float32), 0.0)
            y = jnp.dot(h, w2, preferred_element_type=jnp.float32)  # (2B, C)
            out = jax.nn.sigmoid(y[:batch] + y[batch:])
            out_ref[...] = out.astype(out_ref.dtype)

    return kernel


def _pick_spatial_tile(hw, b, c, itemsize, requested=None):
    """Largest lane-multiple tile whose triple-buffer fits ~12 MiB of VMEM."""
    if requested is not None:
        s_tile = int(requested)
    else:
        per_lane = max(1, b * c * itemsize)
        budget_lanes = (4 * 1024 * 1024) // per_lane       # ~4 MiB per buffer
        s_tile = max(_LANE, (budget_lanes // _LANE) * _LANE)
        s_tile = min(s_tile, 2048)
    if s_tile >= hw or hw <= _LANE:
        return hw                    # single full-extent block (always legal)
    return max(_LANE, (s_tile // _LANE) * _LANE)


def channel_attention(x, fc1_w, fc2_w, *, spatial_tile=None):
    """x: (B, C, H, W) NCHW.  fc1_w: (C//r, C), fc2_w: (C, C//r) (PyTorch).

    Returns (B, C, 1, 1) sigmoid attention weights, matching the PyTorch module.
    """
    B, C, H, W = x.shape
    hidden = fc1_w.shape[0]
    hw = H * W
    x3 = x.reshape(B, C, hw)

    # PyTorch Linear computes y = v @ W.T; pre-transpose weights for the kernel.
    w1 = jnp.asarray(fc1_w).T      # (C, hidden)
    w2 = jnp.asarray(fc2_w).T      # (hidden, C)

    itemsize = jnp.dtype(x.dtype).itemsize
    s_tile = _pick_spatial_tile(hw, B, C, itemsize, spatial_tile)
    n_s = pl.cdiv(hw, s_tile)
    needs_mask = (hw % s_tile) != 0

    kernel = _make_channel_attention_kernel(B, hw, s_tile, needs_mask)

    # Deeper pipelining on the streamed input when there are enough steps.
    x_spec_kwargs = {}
    if n_s >= 3:
        x_spec_kwargs["pipeline_mode"] = pl.Buffered(3)
    x_spec = pl.BlockSpec((B, C, s_tile), lambda s: (0, 0, s), **x_spec_kwargs)

    # Advisory cost: one pass over x dominates; FLOPs are negligible.
    bytes_accessed = int(x3.size * itemsize
                         + w1.size * jnp.dtype(w1.dtype).itemsize
                         + w2.size * jnp.dtype(w2.dtype).itemsize
                         + B * C * itemsize)
    cost = pl.CostEstimate(flops=int(8 * B * C * hidden),
                           transcendentals=int(B * C),
                           bytes_accessed=bytes_accessed)

    out = pl.pallas_call(
        kernel,
        out_shape=jax.ShapeDtypeStruct((B, C), x.dtype),
        grid=(n_s,),
        in_specs=[
            x_spec,
            pl.BlockSpec((C, hidden), lambda s: (0, 0)),   # resident (const idx)
            pl.BlockSpec((hidden, C), lambda s: (0, 0)),   # resident (const idx)
        ],
        out_specs=pl.BlockSpec((B, C), lambda s: (0, 0)),
        scratch_shapes=[
            pltpu.VMEM((B, C), jnp.float32),   # running sum
            pltpu.VMEM((B, C), jnp.float32),   # running max
        ],
        compiler_params=pltpu.CompilerParams(
            dimension_semantics=("arbitrary",)),           # spatial reduction
        cost_estimate=cost,
    )(x3, w1, w2)

    return out.reshape(B, C, 1, 1)


def channel_attention_ref(x, fc1_w, fc2_w):
    """Pure-JAX reference mirroring the PyTorch forward."""
    B, C, H, W = x.shape
    xf = x.astype(jnp.float32)
    avg = jnp.mean(xf, axis=(2, 3))                 # (B, C)
    mx = jnp.max(xf, axis=(2, 3))                   # (B, C)

    def fc(v):
        h = jnp.maximum(v @ fc1_w.astype(jnp.float32).T, 0.0)
        return h @ fc2_w.astype(jnp.float32).T

    out = jax.nn.sigmoid(fc(avg) + fc(mx))
    return out.reshape(B, C, 1, 1).astype(x.dtype)


def _run_case(key, B, C, H, W, reduction, spatial_tile):
    hidden = max(1, C // reduction)
    kx, k1, k2 = jax.random.split(key, 3)
    x = jax.random.normal(kx, (B, C, H, W), dtype=jnp.float32)
    bound1 = 1.0 / np.sqrt(C)
    bound2 = 1.0 / np.sqrt(hidden)
    fc1_w = jax.random.uniform(k1, (hidden, C), jnp.float32, -bound1, bound1)
    fc2_w = jax.random.uniform(k2, (C, hidden), jnp.float32, -bound2, bound2)

    out = channel_attention(x, fc1_w, fc2_w, spatial_tile=spatial_tile)
    out = jax.block_until_ready(out)
    ref = channel_attention_ref(x, fc1_w, fc2_w)
    np.testing.assert_allclose(np.asarray(out), np.asarray(ref),
                               rtol=1e-5, atol=1e-5)
    assert out.shape == (B, C, 1, 1)


if __name__ == "__main__":
    key = jax.random.PRNGKey(0)
    k1, k2, k3 = jax.random.split(key, 3)

    # Case 1: multi-step spatial pipeline (tile 128, H*W=256 -> 2 grid steps).
    _run_case(k1, B=2, C=32, H=16, W=16, reduction=16, spatial_tile=128)

    # Case 2: ragged spatial extent (H*W=900) -> masked last tile + Buffered(3).
    _run_case(k2, B=2, C=64, H=30, W=30, reduction=16, spatial_tile=128)

    # Case 3: auto tile selection (single full-extent block for this shape).
    _run_case(k3, B=2, C=32, H=16, W=16, reduction=16, spatial_tile=None)

    print("KERNEL_OK")
</pallas_src>

<mosaic_0001>
module attributes {stable_mosaic.version = 11 : i64} {
  func.func @kernel(%arg0: i32, %arg1: memref<2x32x128xf32, #tpu.memory_space<vmem>>, %arg2: memref<32x2xf32, #tpu.memory_space<vmem>>, %arg3: memref<2x32xf32, #tpu.memory_space<vmem>>, %arg4: memref<2x32xf32, #tpu.memory_space<vmem>>, %arg5: memref<2x32xf32, #tpu.memory_space<vmem>>, %arg6: memref<2x32xf32, #tpu.memory_space<vmem>>) attributes {dimension_semantics = [#tpu.dimension_semantics<arbitrary>], iteration_bounds = array<i64: 2>, scalar_prefetch = 0 : i64, scratch_operands = 2 : i64, tpu.core_type = #tpu.core_type<tc>, window_params = [{transform_indices = @transform_0, window_bounds = array<i64: 2, 32, 128>}, {pipeline_mode = #tpu.pipeline_mode<synchronous>, transform_indices = @transform_1, window_bounds = array<i64: 32, 2>}, {pipeline_mode = #tpu.pipeline_mode<synchronous>, transform_indices = @transform_2, window_bounds = array<i64: 2, 32>}, {pipeline_mode = #tpu.pipeline_mode<synchronous>, transform_indices = @transform_3, window_bounds = array<i64: 2, 32>}]} {
    %c0_i32 = arith.constant 0 : i32
    %0 = arith.cmpi eq, %arg0, %c0_i32 : i32
    %1 = arith.extui %0 : i1 to i32
    %c0_i32_0 = arith.constant 0 : i32
    %2 = arith.cmpi ne, %1, %c0_i32_0 : i32
    scf.if %2 {
      %cst_13 = arith.constant 0.000000e+00 : f32
      %15 = vector.broadcast %cst_13 : f32 to vector<2x32xf32>
      %c0_14 = arith.constant 0 : index
      %c0_15 = arith.constant 0 : index
      %16 = vector.load %arg5[%c0_14, %c0_15] : memref<2x32xf32, #tpu.memory_space<vmem>>, vector<2x32xf32>
      tpu.vector_store %arg5[%c0_14, %c0_15], %15 {strides = array<i32>} : memref<2x32xf32, #tpu.memory_space<vmem>>, vector<2x32xf32>,
      %cst_16 = arith.constant 0xFF800000 : f32
      %17 = vector.broadcast %cst_16 : f32 to vector<2x32xf32>
      %c0_17 = arith.constant 0 : index
      %c0_18 = arith.constant 0 : index
      %18 = vector.load %arg6[%c0_17, %c0_18] : memref<2x32xf32, #tpu.memory_space<vmem>>, vector<2x32xf32>
      tpu.vector_store %arg6[%c0_17, %c0_18], %17 {strides = array<i32>} : memref<2x32xf32, #tpu.memory_space<vmem>>, vector<2x32xf32>,
    } else {
    }
    %c0 = arith.constant 0 : index
    %c0_1 = arith.constant 0 : index
    %c0_2 = arith.constant 0 : index
    %3 = vector.load %arg1[%c0, %c0_1, %c0_2] : memref<2x32x128xf32, #tpu.memory_space<vmem>>, vector<2x32x128xf32>
    %c0_3 = arith.constant 0 : index
    %c0_4 = arith.constant 0 : index
    %4 = vector.load %arg5[%c0_3, %c0_4] : memref<2x32xf32, #tpu.memory_space<vmem>>, vector<2x32xf32>
    %cst = arith.constant dense<0.000000e+00> : vector<2x32xf32>
    %5 = vector.multi_reduction <add>, %3, %cst [2] : vector<2x32x128xf32> to vector<2x32xf32>
    %6 = arith.addf %4, %5 : vector<2x32xf32>
    %c0_5 = arith.constant 0 : index
    %c0_6 = arith.constant 0 : index
    %7 = vector.load %arg5[%c0_5, %c0_6] : memref<2x32xf32, #tpu.memory_space<vmem>>, vector<2x32xf32>
    tpu.vector_store %arg5[%c0_5, %c0_6], %6 {strides = array<i32>} : memref<2x32xf32, #tpu.memory_space<vmem>>, vector<2x32xf32>,
    %c0_7 = arith.constant 0 : index
    %c0_8 = arith.constant 0 : index
    %8 = vector.load %arg6[%c0_7, %c0_8] : memref<2x32xf32, #tpu.memory_space<vmem>>, vector<2x32xf32>
    %cst_9 = arith.constant dense<0xFF800000> : vector<2x32xf32>
    %9 = vector.multi_reduction <maximumf>, %3, %cst_9 [2] : vector<2x32x128xf32> to vector<2x32xf32>
    %10 = arith.maximumf %8, %9 : vector<2x32xf32>
    %c0_10 = arith.constant 0 : index
    %c0_11 = arith.constant 0 : index
    %11 = vector.load %arg6[%c0_10, %c0_11] : memref<2x32xf32, #tpu.memory_space<vmem>>, vector<2x32xf32>
    tpu.vector_store %arg6[%c0_10, %c0_11], %10 {strides = array<i32>} : memref<2x32xf32, #tpu.memory_space<vmem>>, vector<2x32xf32>,
    %c1_i32 = arith.constant 1 : i32
    %12 = arith.cmpi eq, %arg0, %c1_i32 : i32
    %13 = arith.extui %12 : i1 to i32
    %c0_i32_12 = arith.constant 0 : i32
    %14 = arith.cmpi ne, %13, %c0_i32_12 : i32
    scf.if %14 {
      %c0_13 = arith.constant 0 : index
      %c0_14 = arith.constant 0 : index
      %15 = vector.load %arg5[%c0_13, %c0_14] : memref<2x32xf32, #tpu.memory_space<vmem>>, vector<2x32xf32>
      %cst_15 = arith.constant 3.906250e-03 : f32
      %16 = vector.broadcast %cst_15 : f32 to vector<2x32xf32>
      %17 = arith.mulf %15, %16 : vector<2x32xf32>
      %c0_16 = arith.constant 0 : index
      %c0_17 = arith.constant 0 : index
      %18 = vector.load %arg6[%c0_16, %c0_17] : memref<2x32xf32, #tpu.memory_space<vmem>>, vector<2x32xf32>
      %19 = tpu.concatenate %17, %18 in 0 : vector<2x32xf32>, vector<2x32xf32> -> vector<4x32xf32>
      %c0_18 = arith.constant 0 : index
      %c0_19 = arith.constant 0 : index
      %20 = vector.load %arg2[%c0_18, %c0_19] : memref<32x2xf32, #tpu.memory_space<vmem>>, vector<32x2xf32>
      %c0_20 = arith.constant 0 : index
      %c0_21 = arith.constant 0 : index
      %21 = vector.load %arg3[%c0_20, %c0_21] : memref<2x32xf32, #tpu.memory_space<vmem>>, vector<2x32xf32>
      %cst_22 = arith.constant dense<0.000000e+00> : vector<4x2xf32>
      %22 = tpu.matmul %19, %20, %cst_22 {dimension_numbers = #tpu.dot_dimension_numbers<[1], [0], [0], [1], [0, 0, 1, 1], [], []>} : vector<4x32xf32>, vector<32x2xf32>, vector<4x2xf32> -> vector<4x2xf32>
      %cst_23 = arith.constant 0.000000e+00 : f32
      %23 = vector.broadcast %cst_23 : f32 to vector<4x2xf32>
      %24 = arith.maximumf %22, %23 : vector<4x2xf32>
      %cst_24 = arith.constant dense<0.000000e+00> : vector<4x32xf32>
      %25 = tpu.matmul %24, %21, %cst_24 {dimension_numbers = #tpu.dot_dimension_numbers<[1], [0], [0], [1], [0, 0, 1, 1], [], []>} : vector<4x2xf32>, vector<2x32xf32>, vector<4x32xf32> -> vector<4x32xf32>
      %26 = vector.extract_strided_slice %25 {offsets = [0, 0], sizes = [2, 32], strides = [1, 1]} : vector<4x32xf32> to vector<2x32xf32>
      %27 = vector.extract_strided_slice %25 {offsets = [2, 0], sizes = [2, 32], strides = [1, 1]} : vector<4x32xf32> to vector<2x32xf32>
      %28 = arith.addf %26, %27 : vector<2x32xf32>
      %29 = arith.negf %28 : vector<2x32xf32>
      %30 = math.exp %29 : vector<2x32xf32>
      %cst_25 = arith.constant 1.000000e+00 : f32
      %31 = vector.broadcast %cst_25 : f32 to vector<2x32xf32>
      %32 = arith.addf %31, %30 : vector<2x32xf32>
      %33 = arith.divf %31, %32 : vector<2x32xf32>
      %c0_26 = arith.constant 0 : index
      %c0_27 = arith.constant 0 : index
      %34 = vector.load %arg4[%c0_26, %c0_27] : memref<2x32xf32, #tpu.memory_space<vmem>>, vector<2x32xf32>
      tpu.vector_store %arg4[%c0_26, %c0_27], %33 {strides = array<i32>} : memref<2x32xf32, #tpu.memory_space<vmem>>, vector<2x32xf32>,
    } else {
    }
    return
  }
  func.func @transform_0(%arg0: i32) -> (i32, i32, i32) {
    %c0_i32 = arith.constant 0 : i32
    %c0_i32_0 = arith.constant 0 : i32
    %c0_i32_1 = arith.constant 0 : i32
    return %c0_i32, %c0_i32_0, %arg0 : i32, i32, i32
  }
  func.func @transform_1(%arg0: i32) -> (i32, i32) {
    %c0_i32 = arith.constant 0 : i32
    %c0_i32_0 = arith.constant 0 : i32
    %c0_i32_1 = arith.constant 0 : i32
    return %c0_i32, %c0_i32_0 : i32, i32
  }
  func.func @transform_2(%arg0: i32) -> (i32, i32) {
    %c0_i32 = arith.constant 0 : i32
    %c0_i32_0 = arith.constant 0 : i32
    %c0_i32_1 = arith.constant 0 : i32
    return %c0_i32, %c0_i32_0 : i32, i32
  }
  func.func @transform_3(%arg0: i32) -> (i32, i32) {
    %c0_i32 = arith.constant 0 : i32
    %c0_i32_0 = arith.constant 0 : i32
    %c0_i32_1 = arith.constant 0 : i32
    return %c0_i32, %c0_i32_0 : i32, i32
  }
}

</mosaic_0001>

<llo_original>
// kernel: tpu_custom_call.1
$region0: #{tpu_custom_call.1}
  #allocation0 [shape = 'u32[]', space=smem, size = 0x4, offset = 0x4, fixed_abs, tag = 'smem constant byte address 0x4 - core index']
  #allocation1 [shape = 'u32[144,128]{1,0:T(1,128)}', space=vmem, size = 0x12000, scoped, tag = 'internal scratch']
  #allocation2 [shape = 'f32[2,32]{1,0:T(2,128)}', space=vmem, size = 0x400, scoped, tag = 'scratch operand']
  #allocation3 [shape = 'f32[2,32]{1,0:T(2,128)}', space=vmem, size = 0x400, scoped, tag = 'scratch operand']
  %s0 = inlined_call_operand.hbm [shape: f32[2,32,256], index: 0, kind: input, shape index: {}]
  %s1 = inlined_call_operand.vmem [shape: f32[32,2], index: 1, kind: input, shape index: {}]
  %s2 = inlined_call_operand.vmem [shape: f32[2,32], index: 2, kind: input, shape index: {}]
  %s3 = inlined_call_operand.hbm [shape: f32[2,32], index: 3, kind: output, shape index: {}]
  %s4 = sld [smem:[#allocation0]]
  $region57: #{tpu_custom_call.1} parent=0
    _
  %s6 = ssub.s32 1, %s4
  %s7 = scalar_select 0, %s6, %s4
  $region1: #{tpu_custom_call.1} parent=0
    #allocation4 [shape = 'u8[65536]{0}', space=vmem, size = 0x10000, scoped, tag = 'input window, operand 0']
    #allocation5 [shape = 's32[2]{0}', space=sflag, size = 0x8, scoped, tag = 'scoped memory for tpu_custom_call.1']
    #allocation6 [shape = 's32[2]{0}', space=sflag, size = 0x8, scoped, tag = 'scoped memory for tpu_custom_call.1']
    #allocation7 [shape = 'u8[1024]{0}', space=vmem, size = 0x400, scoped, tag = 'output window, operand 0, single buffered']
    %8 = vsyncpa [#allocation5], 0
    %s9 = scalar_lea.sflag [#allocation5], 1
    %10 = vsyncpa %s9, 0
    %11 = vsyncpa [#allocation6], 0
    loop: start=0, step=1, limit=4
    $region2: #{tpu_custom_call.1} parent=1 // loop_pre_header
      _
    $region3: #{tpu_custom_call.1} parent=1 // loop_header
      %s13 = sphi 0, %s17
      %p14 = scmp.ge.s32.totalorder %s13, 4
      %s23 = sphi 0, %s25
      %s26 = sphi 0, %s23
      %s27 = sphi 0, %s26
      %s43 = sphi 0, %s27
      %s47 = sphi 0, %s47
      %s49 = sphi 0, %s47
      %s50 = sphi 0, %s49
      %s64 = sphi 0, %s50
      %s68 = sphi 0, %s68
      %s70 = sphi 0, %s68
      %s71 = sphi 0, %s70
      %s85 = sphi 0, %s71
      %s89 = sphi 0, %s89
      %s91 = sphi 0, %s89
      %s92 = sphi 0, %s91
      %s106 = sphi 0, %s92
    $region4: #{tpu_custom_call.1} parent=1 // loop_header_branch
      %16 = sbr.rel (%p14) target = $region8
    $region5: #{tpu_custom_call.1} parent=1 // loop_body
      %s18 = ssub.s32 %s13, 1
      %s19 = ssub.s32 %s13, 2
      %s20 = sadd.s32 %s13, 1
      %s21 = ssub.s32 %s13, %s20
      %p22 = scmp.eq.s32.totalorder %s21, 0
      %s24 = sadd.s32 %s23, 1
      %s25 = scalar_select %p22, %s23, %s24
      %p28 = pneg %p22
      %p29 = scmp.eq.s32.totalorder %s13, 1
      %p30 = por %p28, %p29
      %p31 = scmp.ne.s32.totalorder %s23, %s26
      %p32 = scmp.eq.s32.totalorder %s13, 0
      %p33 = por %p31, %p32
      %p34 = scmp.ne.s32.totalorder %s23, %s26
      %p35 = scmp.eq.s32.totalorder %s18, 1
      %p36 = por %p34, %p35
      %p37 = scmp.ne.s32.totalorder %s26, %s27
      %p38 = scmp.eq.s32.totalorder %s18, 0
      %p39 = por %p37, %p38
      %p40 = scmp.ne.s32.totalorder %s26, %s27
      %p41 = scmp.eq.s32.totalorder %s19, 1
      %p42 = por %p40, %p41
      %p44 = scmp.ne.s32.totalorder %s27, %s43
      %p45 = scmp.eq.s32.totalorder %s19, 0
      %p46 = por %p44, %p45
      %s48 = sadd.s32 %s47, 1
      %p51 = scmp.eq.s32.totalorder %s13, 1
      %p52 = scmp.ne.s32.totalorder %s47, %s49
      %p53 = scmp.eq.s32.totalorder %s13, 0
      %p54 = por %p52, %p53
      %p55 = scmp.ne.s32.totalorder %s47, %s49
      %p56 = scmp.eq.s32.totalorder %s18, 1
      %p57 = por %p55, %p56
      %p58 = scmp.ne.s32.totalorder %s49, %s50
      %p59 = scmp.eq.s32.totalorder %s18, 0
      %p60 = por %p58, %p59
      %p61 = scmp.ne.s32.totalorder %s49, %s50
      %p62 = scmp.eq.s32.totalorder %s19, 1
      %p63 = por %p61, %p62
      %p65 = scmp.ne.s32.totalorder %s50, %s64
      %p66 = scmp.eq.s32.totalorder %s19, 0
      %p67 = por %p65, %p66
      %s69 = sadd.s32 %s68, 1
      %p72 = scmp.eq.s32.totalorder %s13, 1
      %p73 = scmp.ne.s32.totalorder %s68, %s70
      %p74 = scmp.eq.s32.totalorder %s13, 0
      %p75 = por %p73, %p74
      %p76 = scmp.ne.s32.totalorder %s68, %s70
      %p77 = scmp.eq.s32.totalorder %s18, 1
      %p78 = por %p76, %p77
      %p79 = scmp.ne.s32.totalorder %s70, %s71
      %p80 = scmp.eq.s32.totalorder %s18, 0
      %p81 = por %p79, %p80
      %p82 = scmp.ne.s32.totalorder %s70, %s71
      %p83 = scmp.eq.s32.totalorder %s19, 1
      %p84 = por %p82, %p83
      %p86 = scmp.ne.s32.totalorder %s71, %s85
      %p87 = scmp.eq.s32.totalorder %s19, 0
      %p88 = por %p86, %p87
      %s90 = sadd.s32 %s89, 1
      %p93 = scmp.eq.s32.totalorder %s13, 1
      %p94 = scmp.ne.s32.totalorder %s89, %s91
      %p95 = scmp.eq.s32.totalorder %s13, 0
      %p96 = por %p94, %p95
      %p97 = scmp.ne.s32.totalorder %s89, %s91
      %p98 = scmp.eq.s32.totalorder %s18, 1
      %p99 = por %p97, %p98
      %p100 = scmp.ne.s32.totalorder %s91, %s92
      %p101 = scmp.eq.s32.totalorder %s18, 0
      %p102 = por %p100, %p101
      %p103 = scmp.ne.s32.totalorder %s91, %s92
      %p104 = scmp.eq.s32.totalorder %s19, 1
      %p105 = por %p103, %p104
      %p107 = scmp.ne.s32.totalorder %s92, %s106
      %p108 = scmp.eq.s32.totalorder %s19, 0
      %p109 = por %p107, %p108
      %p110 = scmp.le.s32.totalorder 1, %s13
      %p111 = scmp.lt.s32.totalorder %s13, 3
      %p112 = pnand %p110, %p111
      %p113 = pneg %p112
      // Predicated region
      $region9: #{tpu_custom_call.1} parent=5 // pred_check
        _
      $region10: #{tpu_custom_call.1} parent=5 // pred_check_branch
        %115 = sbr.rel (%p112) target = $region12
      $region11: #{tpu_custom_call.1} parent=5 // pred_region
        %s116 = ssub.s32 %s13, 1
        // Predicated region
        $region13: #{tpu_custom_call.1} parent=11 // pred_check
          %p117 = pneg %p60
        $region14: #{tpu_custom_call.1} parent=11 // pred_check_branch
          %119 = sbr.rel (%p117) target = $region16
        $region15: #{tpu_custom_call.1} parent=11 // pred_region
          _
        $region16: #{tpu_custom_call.1} parent=11 // pred_fallthru
          _
        // Predicated region
        $region17: #{tpu_custom_call.1} parent=11 // pred_check
          %p120 = pneg %p81
        $region18: #{tpu_custom_call.1} parent=11 // pred_check_branch
          %122 = sbr.rel (%p120) target = $region20
        $region19: #{tpu_custom_call.1} parent=11 // pred_region
          _
        $region20: #{tpu_custom_call.1} parent=11 // pred_fallthru
          _
      $region12: #{tpu_custom_call.1} parent=5 // pred_fallthru
        _
      %p123 = scmp.lt.s32.totalorder %s13, 2
      // Predicated region
      $region21: #{tpu_custom_call.1} parent=5 // pred_check
        %p124 = pneg %p123
      $region22: #{tpu_custom_call.1} parent=5 // pred_check_branch
        %126 = sbr.rel (%p124) target = $region24
      $region23: #{tpu_custom_call.1} parent=5 // pred_region
        // Predicated region
        $region25: #{tpu_custom_call.1} parent=23 // pred_check
          %p127 = pneg %p33
        $region26: #{tpu_custom_call.1} parent=23 // pred_check_branch
          %129 = sbr.rel (%p127) target = $region28
        $region27: #{tpu_custom_call.1} parent=23 // pred_region
          %s130 = sand.u32 %s23, 1
          %s131 = scalar_lea.sflag [#allocation5], %s130
          %s132 = sand.u32 %s23, 1
          %s133 = smul.addr %s132, 64
          %s134 = scalar_lea.vmem [#allocation4], %s133
          %s136 = ssub.s32 1024, 1024
          %137 = vsyncadd %s131, %s136
          %s138 = smul.addr %s13, 128
          %s139 = scalar_lea.hbm %s0, %s138
          %s140 = sshll.u32 %s134, 4
          %s141 = int_to_ptr.vmem [resolvable:$true] %s140
          %146 = dma.hbm_to_vmem [thread:$0]  %s139, 1024, %s141, %s131, 256, 128, 8
        $region28: #{tpu_custom_call.1} parent=23 // pred_fallthru
          _
      $region24: #{tpu_custom_call.1} parent=5 // pred_fallthru
        _
      %p147 = scmp.le.s32.totalorder 1, %s13
      %p148 = scmp.lt.s32.totalorder %s13, 3
      %p149 = pnand %p147, %p148
      %p150 = pneg %p149
      // Predicated region
      $region29: #{tpu_custom_call.1} parent=5 // pred_check
        _
      $region30: #{tpu_custom_call.1} parent=5 // pred_check_branch
        %152 = sbr.rel (%p149) target = $region32
      $region31: #{tpu_custom_call.1} parent=5 // pred_region
        %s153 = ssub.s32 %s13, 1
        %s154 = sand.u32 %s26, 1
        %s155 = scalar_lea.sflag [#allocation5], %s154
        %s156 = sand.u32 %s26, 1
        %s157 = smul.addr %s156, 64
        %s158 = scalar_lea.vmem [#allocation4], %s157
        // Predicated region
        $region33: #{tpu_custom_call.1} parent=31 // pred_check
          %p159 = pneg %p39
        $region34: #{tpu_custom_call.1} parent=31 // pred_check_branch
          %161 = sbr.rel (%p159) target = $region36
        $region35: #{tpu_custom_call.1} parent=31 // pred_region
          %162 = dma.done %s155, 1024
        $region36: #{tpu_custom_call.1} parent=31 // pred_fallthru
          _
        %s163 = sand.u32 %s26, 1
        %s164 = scalar_lea.sflag [#allocation5], %s163
        %s165 = sand.u32 %s26, 1
        %s166 = smul.addr %s165, 64
        %s167 = scalar_lea.vmem [#allocation4], %s166
        %p168 = pneg %p39
        %p169 = pneg %p36
        %p170 = pneg %p60
        %p171 = pneg %p57
        %p172 = pneg %p81
        %p173 = pneg %p78
        %p174 = pneg %p102
        %p175 = pneg %p99
        %p176 = scmp.eq.s32.totalorder %s18, 0
        // Predicated region
        $region37: #{tpu_custom_call.1} parent=31 // pred_check
          %p177 = pneg %p176
        $region38: #{tpu_custom_call.1} parent=31 // pred_check_branch
          %179 = sbr.rel (%p177) target = $region40
        $region39: #{tpu_custom_call.1} parent=31 // pred_region
          %vm180 = vcmask 254976
          %181 = vst.msk [vmem:[#allocation2] sm:$0x3] %vm180, 0.0
          %182 = vst.msk [vmem:[#allocation3] sm:$0x3] %vm180, -inf
        $region40: #{tpu_custom_call.1} parent=31 // pred_fallthru
          _
        %v183 = vld [vmem:[%s158] sm:$0xff]
        %v184 = vld [vmem:[%s158 + $0x8] sm:$0xff]
        %v185 = vld [vmem:[%s158 + $0x10] sm:$0xff]
        %v186 = vld [vmem:[%s158 + $0x18] sm:$0xff]
        %v187 = vld [vmem:[%s158 + $0x20] sm:$0xff]
        %v188 = vld [vmem:[%s158 + $0x28] sm:$0xff]
        %v189 = vld [vmem:[%s158 + $0x30] sm:$0xff]
        %v190 = vld [vmem:[%s158 + $0x38] sm:$0xff]
        %v191 = vld [vmem:[#allocation2] sm:$0x3]
        %192 = vadd.xlane.f32.xlu0 %v183
        %v193 = vpop.xlane.xlu0 %192
        %194 = vadd.xlane.f32.xlu0 %v184
        %v195 = vpop.xlane.xlu0 %194
        %196 = vadd.xlane.f32.xlu0 %v185
        %v197 = vpop.xlane.xlu0 %196
        %198 = vadd.xlane.f32.xlu0 %v186
        %v199 = vpop.xlane.xlu0 %198
        %200 = vadd.xlane.f32.xlu0 %v187
        %v201 = vpop.xlane.xlu0 %200
        %202 = vadd.xlane.f32.xlu0 %v188
        %v203 = vpop.xlane.xlu0 %202
        %204 = vadd.xlane.f32.xlu0 %v189
        %v205 = vpop.xlane.xlu0 %204
        %206 = vadd.xlane.f32.xlu0 %v190
        %v207 = vpop.xlane.xlu0 %206
        %v216 = vlaneseq
        %v217 = vand.u32 %v216, 127
        %v218 = vlaneseq
        %v219 = vshrl.u32 %v218, 7
        %v220 = vsub.s32 %v217, %v219
        %v221 = vrot.slane %v193, %v220
        %v222 = vadd.s32 %v217, 4294967288
        %v223 = vlaneseq
        %v224 = vshrl.u32 %v223, 7
        %v225 = vsub.s32 %v222, %v224
        %v226 = vrot.slane %v195, %v225
        %vm227 = vcmask 130112
        %v228 = vsel %vm227, %v226, %v221
        %v229 = vadd.s32 %v217, 4294967280
        %v230 = vlaneseq
        %v231 = vshrl.u32 %v230, 7
        %v232 = vsub.s32 %v229, %v231
        %v233 = vrot.slane %v197, %v232
        %vm234 = vcmask 195712
        %v235 = vsel %vm234, %v233, %v228
        %v236 = vadd.s32 %v217, 4294967272
        %v237 = vlaneseq
        %v238 = vshrl.u32 %v237, 7
        %v239 = vsub.s32 %v236, %v238
        %v240 = vrot.slane %v199, %v239
        %vm241 = vcmask 261312
        %v242 = vsel %vm241, %v240, %v235
        %v243 = vlaneseq
        %v244 = vshrl.u32 %v243, 7
        %v245 = vsub.s32 %v217, %v244
        %v246 = vrot.slane %v201, %v245
        %v247 = vlaneseq
        %v248 = vshrl.u32 %v247, 7
        %v249 = vsub.s32 %v222, %v248
        %v250 = vrot.slane %v203, %v249
        %v251 = vsel %vm227, %v250, %v246
        %v252 = vlaneseq
        %v253 = vshrl.u32 %v252, 7
        %v254 = vsub.s32 %v229, %v253
        %v255 = vrot.slane %v205, %v254
        %v256 = vsel %vm234, %v255, %v251
        %v257 = vlaneseq
        %v258 = vshrl.u32 %v257, 7
        %v259 = vsub.s32 %v236, %v258
        %v260 = vrot.slane %v207, %v259
        %v261 = vsel %vm241, %v260, %v256
        %vm262 = vcmask 1041409
        %v263 = vsel %vm262, %v261, %v242
        %v265 = vadd.f32 %v191, %v263
        %vm266 = vcmask 254976
        %267 = vst.msk [vmem:[#allocation2] sm:$0x3] %vm266, %v265
        %v268 = vld [vmem:[#allocation3] sm:$0x3]
        %269 = vmax.xlane.f32.xlu0 %v183
        %v270 = vpop.xlane.xlu0 %269
        %271 = vmax.xlane.f32.xlu0 %v184
        %v272 = vpop.xlane.xlu0 %271
        %273 = vmax.xlane.f32.xlu0 %v185
        %v274 = vpop.xlane.xlu0 %273
        %275 = vmax.xlane.f32.xlu0 %v186
        %v276 = vpop.xlane.xlu0 %275
        %277 = vmax.xlane.f32.xlu0 %v187
        %v278 = vpop.xlane.xlu0 %277
        %279 = vmax.xlane.f32.xlu0 %v188
        %v280 = vpop.xlane.xlu0 %279
        %281 = vmax.xlane.f32.xlu0 %v189
        %v282 = vpop.xlane.xlu0 %281
        %283 = vmax.xlane.f32.xlu0 %v190
        %v284 = vpop.xlane.xlu0 %283
        %v293 = vlaneseq
        %v294 = vshrl.u32 %v293, 7
        %v295 = vsub.s32 %v217, %v294
        %v296 = vrot.slane %v270, %v295
        %v297 = vlaneseq
        %v298 = vshrl.u32 %v297, 7
        %v299 = vsub.s32 %v222, %v298
        %v300 = vrot.slane %v272, %v299
        %v301 = vsel %vm227, %v300, %v296
        %v302 = vlaneseq
        %v303 = vshrl.u32 %v302, 7
        %v304 = vsub.s32 %v229, %v303
        %v305 = vrot.slane %v274, %v304
        %v306 = vsel %vm234, %v305, %v301
        %v307 = vlaneseq
        %v308 = vshrl.u32 %v307, 7
        %v309 = vsub.s32 %v236, %v308
        %v310 = vrot.slane %v276, %v309
        %v311 = vsel %vm241, %v310, %v306
        %v312 = vlaneseq
        %v313 = vshrl.u32 %v312, 7
        %v314 = vsub.s32 %v217, %v313
        %v315 = vrot.slane %v278, %v314
        %v316 = vlaneseq
        %v317 = vshrl.u32 %v316, 7
        %v318 = vsub.s32 %v222, %v317
        %v319 = vrot.slane %v280, %v318
        %v320 = vsel %vm227, %v319, %v315
        %v321 = vlaneseq
        %v322 = vshrl.u32 %v321, 7
        %v323 = vsub.s32 %v229, %v322
        %v324 = vrot.slane %v282, %v323
        %v325 = vsel %vm234, %v324, %v320
        %v326 = vlaneseq
        %v327 = vshrl.u32 %v326, 7
        %v328 = vsub.s32 %v236, %v327
        %v329 = vrot.slane %v284, %v328
        %v330 = vsel %vm241, %v329, %v325
        %v331 = vsel %vm262, %v330, %v311
        %v333 = vmax.f32 %v268, %v331
        %334 = vst.msk [vmem:[#allocation3] sm:$0x3] %vm266, %v333
        %p335 = scmp.eq.s32.totalorder %s18, 1
        // Predicated region
        $region41: #{tpu_custom_call.1} parent=31 // pred_check
          %p336 = pneg %p335
        $region42: #{tpu_custom_call.1} parent=31 // pred_check_branch
          %338 = sbr.rel (%p336) target = $region44
        $region43: #{tpu_custom_call.1} parent=31 // pred_region
          %v339 = vld [vmem:[#allocation2] sm:$0x3]
          %v340 = vmul.f32 %v339, 0.00390625
          %v341 = vld [vmem:[#allocation3] sm:$0x3]
          %v343 = vrot.slane %v341, 6
          %vm345 = vcmask 1041408
          %v346 = vsel %vm345, %v340, %v343
          %v347 = vld [vmem:[%s1] sm:$0xff]
          %v348 = vld [vmem:[%s1 + $0x8] sm:$0xff]
          %v349 = vld [vmem:[%s1 + $0x10] sm:$0xff]
          %v350 = vld [vmem:[%s1 + $0x18] sm:$0xff]
          %v351 = vld [vmem:[%s2] sm:$0x3]
          %vm352 = vcmask 261120
          %v354 = vsel %vm352, %v346, 0
          %356 = vmatprep.subr.mxu0 0.0
          %357 = vmatpush1.msra.mxu0 %v347
          %358 = vmatprep.subr.mxu0 0.0
          %359 = vmatpush1.msra.mxu0 %v348
          %360 = vmatprep.subr.mxu0 0.0
          %361 = vmatpush1.msra.mxu0 %v349
          %362 = vmatprep.subr.mxu0 0.0
          %363 = vmatpush1.msra.mxu0 %v350
          %364 = vmatprep.subr.mxu0 0.0
          %365 = vmatpush1.msra.mxu0 0.0
          %366 = vmatprep.subr.mxu0 0.0
          %367 = vmatpush1.msra.mxu0 0.0
          %368 = vmatprep.subr.mxu0 0.0
          %369 = vmatpush1.msra.mxu0 0.0
          %370 = vmatprep.subr.mxu0 0.0
          %371 = vmatpush1.msra.mxu0 0.0
          %372 = vmatprep.subr.mxu0 0.0
          %373 = vmatpush1.msra.mxu0 0.0
          %374 = vmatprep.subr.mxu0 0.0
          %375 = vmatpush1.msra.mxu0 0.0
          %376 = vmatprep.subr.mxu0 0.0
          %377 = vmatpush1.msra.mxu0 0.0
          %378 = vmatprep.subr.mxu0 0.0
          %379 = vmatpush1.msra.mxu0 0.0
          %380 = vmatprep.subr.mxu0 0.0
          %381 = vmatpush1.msra.mxu0 0.0
          %382 = vmatprep.subr.mxu0 0.0
          %383 = vmatpush1.msra.mxu0 0.0
          %384 = vmatprep.subr.mxu0 0.0
          %385 = vmatpush1.msra.mxu0 0.0
          %386 = vmatprep.subr.mxu0 0.0
          %387 = vmatpush1.msra.mxu0 0.0
          %388 = vmatprep.subr.mxu0 0.0
          %389 = vmatpush1.msra.mxu0 0.0
          %390 = vmatprep.subr.mxu0 0.0
          %391 = vmatpush1.msra.mxu0 0.0
          %392 = vmatprep.subr.mxu0 0.0
          %393 = vmatpush1.msra.mxu0 0.0
          %394 = vmatprep.subr.mxu0 0.0
          %395 = vmatpush1.msra.mxu0 0.0
          %396 = vmatprep.subr.mxu0 0.0
          %397 = vmatpush1.msra.mxu0 0.0
          %398 = vmatprep.subr.mxu0 0.0
          %399 = vmatpush1.msra.mxu0 0.0
          %400 = vmatprep.subr.mxu0 0.0
          %401 = vmatpush1.msra.mxu0 0.0
          %402 = vmatprep.subr.mxu0 0.0
          %403 = vmatpush1.msra.mxu0 0.0
          %404 = vmatprep.subr.mxu0 0.0
          %405 = vmatpush1.msra.mxu0 0.0
          %406 = vmatprep.subr.mxu0 0.0
          %407 = vmatpush1.msra.mxu0 0.0
          %408 = vmatprep.subr.mxu0 0.0
          %409 = vmatpush1.msra.mxu0 0.0
          %410 = vmatprep.subr.mxu0 0.0
          %411 = vmatpush1.msra.mxu0 0.0
          %412 = vmatprep.subr.mxu0 0.0
          %413 = vmatpush1.msra.mxu0 0.0
          %414 = vmatprep.subr.mxu0 0.0
          %415 = vmatpush1.msra.mxu0 0.0
          %416 = vmatprep.subr.mxu0 0.0
          %417 = vmatpush1.msra.mxu0 0.0
          %418 = vmatprep.subr.mxu0 0.0
          %419 = vmatpush1.msra.mxu0 0.0
          %420 = vmatprep.mubr.f32.mxu0 0.0
          %421 = vmatmul.mubr.f32.gmra.mrb[0].mxu0 %v354
          %v422 = vpop.f32.mrb[0].mxu0
          %v423 = vadd.f32 0.0, %v422
          %v424 = vpop.f32.mrb[0].mxu0
          %425 = vdwg.mxu0
          %v426 = vmax.f32 %v423, 0.0
          %vm427 = vcmask 15360
          %v429 = vsel %vm427, %v426, 0
          %v432 = vsel %vm345, %v351, 0
          %434 = vmatprep.subr.mxu0 0.0
          %435 = vmatpush1.msra.mxu0 %v432
          %436 = vmatprep.subr.mxu0 0.0
          %437 = vmatpush1.msra.mxu0 0.0
          %438 = vmatprep.subr.mxu0 0.0
          %439 = vmatpush1.msra.mxu0 0.0
          %440 = vmatprep.subr.mxu0 0.0
          %441 = vmatpush1.msra.mxu0 0.0
          %442 = vmatprep.subr.mxu0 0.0
          %443 = vmatpush1.msra.mxu0 0.0
          %444 = vmatprep.subr.mxu0 0.0
          %445 = vmatpush1.msra.mxu0 0.0
          %446 = vmatprep.subr.mxu0 0.0
          %447 = vmatpush1.msra.mxu0 0.0
          %448 = vmatprep.subr.mxu0 0.0
          %449 = vmatpush1.msra.mxu0 0.0
          %450 = vmatprep.subr.mxu0 0.0
          %451 = vmatpush1.msra.mxu0 0.0
          %452 = vmatprep.subr.mxu0 0.0
          %453 = vmatpush1.msra.mxu0 0.0
          %454 = vmatprep.subr.mxu0 0.0
          %455 = vmatpush1.msra.mxu0 0.0
          %456 = vmatprep.subr.mxu0 0.0
          %457 = vmatpush1.msra.mxu0 0.0
          %458 = vmatprep.subr.mxu0 0.0
          %459 = vmatpush1.msra.mxu0 0.0
          %460 = vmatprep.subr.mxu0 0.0
          %461 = vmatpush1.msra.mxu0 0.0
          %462 = vmatprep.subr.mxu0 0.0
          %463 = vmatpush1.msra.mxu0 0.0
          %464 = vmatprep.subr.mxu0 0.0
          %465 = vmatpush1.msra.mxu0 0.0
          %466 = vmatprep.subr.mxu0 0.0
          %467 = vmatpush1.msra.mxu0 0.0
          %468 = vmatprep.subr.mxu0 0.0
          %469 = vmatpush1.msra.mxu0 0.0
          %470 = vmatprep.subr.mxu0 0.0
          %471 = vmatpush1.msra.mxu0 0.0
          %472 = vmatprep.subr.mxu0 0.0
          %473 = vmatpush1.msra.mxu0 0.0
          %474 = vmatprep.subr.mxu0 0.0
          %475 = vmatpush1.msra.mxu0 0.0
          %476 = vmatprep.subr.mxu0 0.0
          %477 = vmatpush1.msra.mxu0 0.0
          %478 = vmatprep.subr.mxu0 0.0
          %479 = vmatpush1.msra.mxu0 0.0
          %480 = vmatprep.subr.mxu0 0.0
          %481 = vmatpush1.msra.mxu0 0.0
          %482 = vmatprep.subr.mxu0 0.0
          %483 = vmatpush1.msra.mxu0 0.0
          %484 = vmatprep.subr.mxu0 0.0
          %485 = vmatpush1.msra.mxu0 0.0
          %486 = vmatprep.subr.mxu0 0.0
          %487 = vmatpush1.msra.mxu0 0.0
          %488 = vmatprep.subr.mxu0 0.0
          %489 = vmatpush1.msra.mxu0 0.0
          %490 = vmatprep.subr.mxu0 0.0
          %491 = vmatpush1.msra.mxu0 0.0
          %492 = vmatprep.subr.mxu0 0.0
          %493 = vmatpush1.msra.mxu0 0.0
          %494 = vmatprep.subr.mxu0 0.0
          %495 = vmatpush1.msra.mxu0 0.0
          %496 = vmatprep.subr.mxu0 0.0
          %497 = vmatpush1.msra.mxu0 0.0
          %498 = vmatprep.mubr.f32.mxu0 0.0
          %499 = vmatmul.mubr.f32.gmra.mrb[0].mxu0 %v429
          %v500 = vpop.f32.mrb[0].mxu0
          %v501 = vadd.f32 0.0, %v500
          %v502 = vpop.f32.mrb[0].mxu0
          %503 = vdwg.mxu0
          %v505 = vrot.slane %v501, 2
          %v507 = vadd.f32 %v501, %v505
          %v508 = vxor.u32 %v507, 2147483648
          %v509 = vmul.f32 %v508, 1.442695
          %v510 = vpow.pop %v509
          %v511 = vadd.f32 %v510, 1.0
          %v512 = vrcp.pop %v511
          %v513 = vmul.f32 1.0, %v512
          %514 = vst.msk [vmem:[#allocation7] sm:$0x3] %vm266, %v513
        $region44: #{tpu_custom_call.1} parent=31 // pred_fallthru
          _
        // Predicated region
        $region45: #{tpu_custom_call.1} parent=31 // pred_check
          %p515 = pneg %p99
        $region46: #{tpu_custom_call.1} parent=31 // pred_check_branch
          %517 = sbr.rel (%p515) target = $region48
        $region47: #{tpu_custom_call.1} parent=31 // pred_region
          %s519 = ssub.s32 32, 32
          %520 = vsyncadd [#allocation6], %s519
          %s522 = sshll.u32 [#allocation7], 4
          %s523 = int_to_ptr.vmem [resolvable:$true] %s522
          %525 = dma.vmem_to_hbm [thread:$0]  %s523, 32, %s3, [#allocation6]
        $region48: #{tpu_custom_call.1} parent=31 // pred_fallthru
          _
        // Predicated region
        $region49: #{tpu_custom_call.1} parent=31 // pred_check
          %p526 = pneg %p99
        $region50: #{tpu_custom_call.1} parent=31 // pred_check_branch
          %528 = sbr.rel (%p526) target = $region52
        $region51: #{tpu_custom_call.1} parent=31 // pred_region
          %529 = dma.done [#allocation6], 32
        $region52: #{tpu_custom_call.1} parent=31 // pred_fallthru
          _
      $region32: #{tpu_custom_call.1} parent=5 // pred_fallthru
        _
      %p530 = scmp.le.s32.totalorder 2, %s13
      // Predicated region
      $region53: #{tpu_custom_call.1} parent=5 // pred_check
        %p531 = pneg %p530
      $region54: #{tpu_custom_call.1} parent=5 // pred_check_branch
        %533 = sbr.rel (%p531) target = $region56
      $region55: #{tpu_custom_call.1} parent=5 // pred_region
        %s534 = ssub.s32 %s13, 2
      $region56: #{tpu_custom_call.1} parent=5 // pred_fallthru
        _
    $region6: #{tpu_custom_call.1} parent=1 // loop_footer
      %s17 = sadd.s32 1, %s13
    $region7: #{tpu_custom_call.1} parent=1 // loop_footer_branch
      %12 = sbr.rel target = $region3
    $region8: #{tpu_custom_call.1} parent=1 // loop_exit
      _
    %535 = vsyncpa [#allocation5], 1
    %s536 = scalar_lea.sflag [#allocation5], 1
    %537 = vsyncpa %s536, 1
    %538 = vsyncpa [#allocation6], 1
    %s539 = scalar_lea.sflag [#allocation6], 1
    %540 = vsyncpa %s539, 1

</llo_original>
